<compile_context>
chip_gen: v6e
topology: v6e:2x2x1
jax: 0.10.0
libtpu: 0.0.40
codegen_flags: <defaults>
</compile_context>

<pallas_src>
import math
import functools

import jax
import jax.numpy as jnp
from jax.experimental import pallas as pl
from jax.experimental.pallas import tpu as pltpu

LANE = 128


def _round_up(n, m):
    return ((n + m - 1) // m) * m


# ----------------------------------------------------------------------------
# Fused Pallas kernel: Linear -> ReLU -> Linear -> ReLU -> Linear
# Weights arrive pre-cast to bf16; x is cast in-kernel; f32 accumulation and
# f32 bias/ReLU epilogue. All intermediates live in vregs/VMEM.
# ----------------------------------------------------------------------------
def _re_trans_kernel(x_ref, w1_ref, b1_ref, w2_ref, b2_ref, w3_ref, b3_ref,
                     o_ref):
    x = x_ref[...].astype(jnp.bfloat16)

    h = jnp.dot(x, w1_ref[...], preferred_element_type=jnp.float32)
    h = jnp.maximum(h + b1_ref[...], 0.0)                      # (tn, 384) f32

    h = jnp.dot(h.astype(jnp.bfloat16), w2_ref[...],
                preferred_element_type=jnp.float32)
    h = jnp.maximum(h + b2_ref[...], 0.0)                      # (tn, 192) f32

    out = jnp.dot(h.astype(jnp.bfloat16), w3_ref[...],
                  preferred_element_type=jnp.float32)
    out = out + b3_ref[...]                                    # (tn, 128) padded

    o_ref[...] = out.astype(o_ref.dtype)


# ----------------------------------------------------------------------------
# One-time parameter prep (hoisted out of the per-call forward):
#   * cast all weights to bf16 (MXU-native, halves weight DMA bytes)
#   * zero-pad final layer to a lane-dense width (unmasked stores)
#   * reshape biases to (1, N) rows for in-kernel broadcast (kept f32)
# ----------------------------------------------------------------------------
def prepare_re_trans_params(params, num_classes):
    w3 = params["mlp3_w"]
    b3 = params["mlp3_b"]
    m_pad = _round_up(num_classes, LANE)

    w3p = jnp.zeros((w3.shape[0], m_pad), jnp.bfloat16)
    w3p = w3p.at[:, :num_classes].set(w3.astype(jnp.bfloat16))
    b3p = jnp.zeros((1, m_pad), jnp.float32)
    b3p = b3p.at[0, :num_classes].set(b3.astype(jnp.float32))

    return {
        "w1": params["mlp1_w"].astype(jnp.bfloat16),
        "b1": params["mlp1_b"].astype(jnp.float32).reshape(1, -1),
        "w2": params["mlp2_w"].astype(jnp.bfloat16),
        "b2": params["mlp2_b"].astype(jnp.float32).reshape(1, -1),
        "w3": w3p,
        "b3": b3p,
    }


def re_trans_forward(x, prepped, *, num_classes, block_n=1024,
                     return_padded=False):
    """x: (B, num_features*num_bins) f32 -> (B, num_classes) f32
       (or (B, m_pad) lane-dense padded logits if return_padded=True)."""
    B, K = x.shape
    w1, b1 = prepped["w1"], prepped["b1"]   # (K, 384) bf16, (1, 384) f32
    w2, b2 = prepped["w2"], prepped["b2"]   # (384, 192) bf16, (1, 192) f32
    w3, b3 = prepped["w3"], prepped["b3"]   # (192, m_pad) bf16, (1, m_pad) f32
    m_pad = w3.shape[1]

    # Row tiling:
    #  * tiny batch -> single full-array step (no masking, no overhead)
    #  * medium batch -> split into >=2 (8-aligned) steps so v7x's two
    #    TensorCores both get work via the "parallel" grid axis
    #  * large batch -> block_n-row tiles (~85%+ of HBM roofline at 512-1024)
    if B > block_n:
        tn = block_n
    elif B >= 16:
        tn = _round_up(pl.cdiv(B, 2), 8)
    else:
        tn = B
    grid_steps = pl.cdiv(B, tn)
    grid = (grid_steps,)
    full = lambda i: (0, 0)

    # Deeper buffering only on the streaming x input (weights are
    # grid-invariant); only worthwhile when the pipeline is deep enough.
    if grid_steps >= 3:
        x_spec = pl.BlockSpec((tn, K), lambda i: (i, 0),
                              pipeline_mode=pl.Buffered(3))
    else:
        x_spec = pl.BlockSpec((tn, K), lambda i: (i, 0))

    out_padded = pl.pallas_call(
        _re_trans_kernel,
        grid=grid,
        in_specs=[
            x_spec,                                   # x row-tile (streamed)
            pl.BlockSpec(w1.shape, full),
            pl.BlockSpec(b1.shape, full),
            pl.BlockSpec(w2.shape, full),
            pl.BlockSpec(b2.shape, full),
            pl.BlockSpec(w3.shape, full),
            pl.BlockSpec(b3.shape, full),
        ],
        out_specs=pl.BlockSpec((tn, m_pad), lambda i: (i, 0)),
        out_shape=jax.ShapeDtypeStruct((B, m_pad), jnp.float32),
        compiler_params=pltpu.CompilerParams(
            dimension_semantics=("parallel",)),
    )(x, w1, b1, w2, b2, w3, b3)

    if return_padded:
        # Lane-dense padded logits; padded columns are exactly zero
        # (zero-padded w3/b3). Lets the consumer avoid an extra HBM pass.
        return out_padded
    return out_padded[:, :num_classes]


# ----------------------------------------------------------------------------
# Deterministic parameter initialization (PyTorch nn.Linear-style uniform)
# ----------------------------------------------------------------------------
def init_linear(key, in_f, out_f):
    k1, k2 = jax.random.split(key)
    bound = 1.0 / math.sqrt(in_f)
    w = jax.random.uniform(k1, (in_f, out_f), jnp.float32, -bound, bound)
    b = jax.random.uniform(k2, (out_f,), jnp.float32, -bound, bound)
    return w, b


def init_re_trans_params(key, num_features, num_bins, num_classes):
    k1, k2, k3 = jax.random.split(key, 3)
    params = {}
    params["mlp1_w"], params["mlp1_b"] = init_linear(
        k1, num_features * num_bins, 384)
    params["mlp2_w"], params["mlp2_b"] = init_linear(k2, 384, 192)
    params["mlp3_w"], params["mlp3_b"] = init_linear(k3, 192, num_classes)
    return params


if __name__ == "__main__":
    # Small shapes consistent with the module defaults:
    #   num_features=32, num_bins=11 -> input dim 352; num_classes=10; batch=2
    num_features, num_bins, num_classes = 32, 11, 10
    batch = 2

    key = jax.random.PRNGKey(0)
    k_x, k_p = jax.random.split(key)
    x = jax.random.normal(k_x, (batch, num_features * num_bins), jnp.float32)
    params = init_re_trans_params(k_p, num_features, num_bins, num_classes)

    # One-time prep: bf16 weights, padded/ reshaped final layer & biases.
    prepped = prepare_re_trans_params(params, num_classes)

    fwd = jax.jit(functools.partial(re_trans_forward, num_classes=num_classes))

    out = fwd(x, prepped)
    jax.block_until_ready(out)
    assert out.shape == (batch, num_classes), out.shape

    # Reference check (eval-mode: dropout = identity), f32 weights.
    h = jax.nn.relu(x @ params["mlp1_w"] + params["mlp1_b"])
    h = jax.nn.relu(h @ params["mlp2_w"] + params["mlp2_b"])
    ref = h @ params["mlp3_w"] + params["mlp3_b"]
    assert jnp.allclose(out, ref, atol=2e-2, rtol=2e-2), float(
        jnp.max(jnp.abs(out - ref)))

    print("KERNEL_OK")
</pallas_src>

<mosaic_0001>
module attributes {stable_mosaic.version = 11 : i64} {
  func.func @_re_trans_kernel(%arg0: i32, %arg1: memref<2x352xf32, #tpu.memory_space<vmem>>, %arg2: memref<352x384xbf16, #tpu.memory_space<vmem>>, %arg3: memref<1x384xf32, #tpu.memory_space<vmem>>, %arg4: memref<384x192xbf16, #tpu.memory_space<vmem>>, %arg5: memref<1x192xf32, #tpu.memory_space<vmem>>, %arg6: memref<192x128xbf16, #tpu.memory_space<vmem>>, %arg7: memref<1x128xf32, #tpu.memory_space<vmem>>, %arg8: memref<2x128xf32, #tpu.memory_space<vmem>>) attributes {dimension_semantics = [#tpu.dimension_semantics<parallel>], iteration_bounds = array<i64: 1>, scalar_prefetch = 0 : i64, scratch_operands = 0 : i64, tpu.core_type = #tpu.core_type<tc>, window_params = [{transform_indices = @transform_0, window_bounds = array<i64: 2, 352>}, {pipeline_mode = #tpu.pipeline_mode<synchronous>, transform_indices = @transform_1, window_bounds = array<i64: 352, 384>}, {pipeline_mode = #tpu.pipeline_mode<synchronous>, transform_indices = @transform_2, window_bounds = array<i64: 1, 384>}, {pipeline_mode = #tpu.pipeline_mode<synchronous>, transform_indices = @transform_3, window_bounds = array<i64: 384, 192>}, {pipeline_mode = #tpu.pipeline_mode<synchronous>, transform_indices = @transform_4, window_bounds = array<i64: 1, 192>}, {pipeline_mode = #tpu.pipeline_mode<synchronous>, transform_indices = @transform_5, window_bounds = array<i64: 192, 128>}, {pipeline_mode = #tpu.pipeline_mode<synchronous>, transform_indices = @transform_6, window_bounds = array<i64: 1, 128>}, {transform_indices = @transform_7, window_bounds = array<i64: 2, 128>}]} {
    %c0 = arith.constant 0 : index
    %c0_0 = arith.constant 0 : index
    %0 = vector.load %arg1[%c0, %c0_0] : memref<2x352xf32, #tpu.memory_space<vmem>>, vector<2x352xf32>
    %1 = arith.truncf %0 : vector<2x352xf32> to vector<2x352xbf16>
    %c0_1 = arith.constant 0 : index
    %c0_2 = arith.constant 0 : index
    %2 = vector.load %arg2[%c0_1, %c0_2] : memref<352x384xbf16, #tpu.memory_space<vmem>>, vector<352x384xbf16>
    %cst = arith.constant dense<0.000000e+00> : vector<2x384xf32>
    %3 = tpu.matmul %1, %2, %cst {dimension_numbers = #tpu.dot_dimension_numbers<[1], [0], [0], [1], [0, 0, 1, 1], [], []>} : vector<2x352xbf16>, vector<352x384xbf16>, vector<2x384xf32> -> vector<2x384xf32>
    %c0_3 = arith.constant 0 : index
    %c0_4 = arith.constant 0 : index
    %4 = vector.load %arg3[%c0_3, %c0_4] : memref<1x384xf32, #tpu.memory_space<vmem>>, vector<1x384xf32>
    %5 = vector.broadcast %4 : vector<1x384xf32> to vector<2x384xf32>
    %6 = arith.addf %3, %5 : vector<2x384xf32>
    %cst_5 = arith.constant 0.000000e+00 : f32
    %7 = vector.broadcast %cst_5 : f32 to vector<2x384xf32>
    %8 = arith.maximumf %6, %7 : vector<2x384xf32>
    %9 = arith.truncf %8 : vector<2x384xf32> to vector<2x384xbf16>
    %c0_6 = arith.constant 0 : index
    %c0_7 = arith.constant 0 : index
    %10 = vector.load %arg4[%c0_6, %c0_7] : memref<384x192xbf16, #tpu.memory_space<vmem>>, vector<384x192xbf16>
    %cst_8 = arith.constant dense<0.000000e+00> : vector<2x192xf32>
    %11 = tpu.matmul %9, %10, %cst_8 {dimension_numbers = #tpu.dot_dimension_numbers<[1], [0], [0], [1], [0, 0, 1, 1], [], []>} : vector<2x384xbf16>, vector<384x192xbf16>, vector<2x192xf32> -> vector<2x192xf32>
    %c0_9 = arith.constant 0 : index
    %c0_10 = arith.constant 0 : index
    %12 = vector.load %arg5[%c0_9, %c0_10] : memref<1x192xf32, #tpu.memory_space<vmem>>, vector<1x192xf32>
    %13 = vector.broadcast %12 : vector<1x192xf32> to vector<2x192xf32>
    %14 = arith.addf %11, %13 : vector<2x192xf32>
    %cst_11 = arith.constant 0.000000e+00 : f32
    %15 = vector.broadcast %cst_11 : f32 to vector<2x192xf32>
    %16 = arith.maximumf %14, %15 : vector<2x192xf32>
    %17 = arith.truncf %16 : vector<2x192xf32> to vector<2x192xbf16>
    %c0_12 = arith.constant 0 : index
    %c0_13 = arith.constant 0 : index
    %18 = vector.load %arg6[%c0_12, %c0_13] : memref<192x128xbf16, #tpu.memory_space<vmem>>, vector<192x128xbf16>
    %cst_14 = arith.constant dense<0.000000e+00> : vector<2x128xf32>
    %19 = tpu.matmul %17, %18, %cst_14 {dimension_numbers = #tpu.dot_dimension_numbers<[1], [0], [0], [1], [0, 0, 1, 1], [], []>} : vector<2x192xbf16>, vector<192x128xbf16>, vector<2x128xf32> -> vector<2x128xf32>
    %c0_15 = arith.constant 0 : index
    %c0_16 = arith.constant 0 : index
    %20 = vector.load %arg7[%c0_15, %c0_16] : memref<1x128xf32, #tpu.memory_space<vmem>>, vector<1x128xf32>
    %21 = vector.broadcast %20 : vector<1x128xf32> to vector<2x128xf32>
    %22 = arith.addf %19, %21 : vector<2x128xf32>
    %c0_17 = arith.constant 0 : index
    %c0_18 = arith.constant 0 : index
    %23 = vector.load %arg8[%c0_17, %c0_18] : memref<2x128xf32, #tpu.memory_space<vmem>>, vector<2x128xf32>
    tpu.vector_store %arg8[%c0_17, %c0_18], %22 {strides = array<i32>} : memref<2x128xf32, #tpu.memory_space<vmem>>, vector<2x128xf32>,
    return
  }
  func.func @transform_0(%arg0: i32) -> (i32, i32) {
    %c0_i32 = arith.constant 0 : i32
    %c0_i32_0 = arith.constant 0 : i32
    return %arg0, %c0_i32 : i32, i32
  }
  func.func @transform_1(%arg0: i32) -> (i32, i32) {
    %c0_i32 = arith.constant 0 : i32
    %c0_i32_0 = arith.constant 0 : i32
    %c0_i32_1 = arith.constant 0 : i32
    return %c0_i32, %c0_i32_0 : i32, i32
  }
  func.func @transform_2(%arg0: i32) -> (i32, i32) {
    %c0_i32 = arith.constant 0 : i32
    %c0_i32_0 = arith.constant 0 : i32
    %c0_i32_1 = arith.constant 0 : i32
    return %c0_i32, %c0_i32_0 : i32, i32
  }
  func.func @transform_3(%arg0: i32) -> (i32, i32) {
    %c0_i32 = arith.constant 0 : i32
    %c0_i32_0 = arith.constant 0 : i32
    %c0_i32_1 = arith.constant 0 : i32
    return %c0_i32, %c0_i32_0 : i32, i32
  }
  func.func @transform_4(%arg0: i32) -> (i32, i32) {
    %c0_i32 = arith.constant 0 : i32
    %c0_i32_0 = arith.constant 0 : i32
    %c0_i32_1 = arith.constant 0 : i32
    return %c0_i32, %c0_i32_0 : i32, i32
  }
  func.func @transform_5(%arg0: i32) -> (i32, i32) {
    %c0_i32 = arith.constant 0 : i32
    %c0_i32_0 = arith.constant 0 : i32
    %c0_i32_1 = arith.constant 0 : i32
    return %c0_i32, %c0_i32_0 : i32, i32
  }
  func.func @transform_6(%arg0: i32) -> (i32, i32) {
    %c0_i32 = arith.constant 0 : i32
    %c0_i32_0 = arith.constant 0 : i32
    %c0_i32_1 = arith.constant 0 : i32
    return %c0_i32, %c0_i32_0 : i32, i32
  }
  func.func @transform_7(%arg0: i32) -> (i32, i32) {
    %c0_i32 = arith.constant 0 : i32
    %c0_i32_0 = arith.constant 0 : i32
    return %arg0, %c0_i32 : i32, i32
  }
}

</mosaic_0001>

<llo_original>
// kernel: re_trans_forward.1
$region0: #{re_trans_forward.1}
  #allocation0 [shape = 'u32[]', space=smem, size = 0x4, offset = 0x4, fixed_abs, tag = 'smem constant byte address 0x4 - core index']
  #allocation1 [shape = 'u32[144,128]{1,0:T(1,128)}', space=vmem, size = 0x12000, scoped, tag = 'internal scratch']
  %s0 = inlined_call_operand.vmem [shape: f32[2,352], index: 0, kind: input, shape index: {}]
  %s1 = inlined_call_operand.vmem [shape: bf16[352,384], index: 1, kind: input, shape index: {}]
  %s2 = inlined_call_operand.vmem [shape: f32[1,384], index: 2, kind: input, shape index: {}]
  %s3 = inlined_call_operand.vmem [shape: bf16[384,192], index: 3, kind: input, shape index: {}]
  %s4 = inlined_call_operand.vmem [shape: f32[1,192], index: 4, kind: input, shape index: {}]
  %s5 = inlined_call_operand.vmem [shape: bf16[192,128], index: 5, kind: input, shape index: {}]
  %s6 = inlined_call_operand.vmem [shape: f32[1,128], index: 6, kind: input, shape index: {}]
  %s7 = inlined_call_operand.hbm [shape: f32[2,128], index: 7, kind: output, shape index: {}]
  %s8 = sld [smem:[#allocation0]]
  $region38: #{re_trans_forward.1} parent=0
    _
  %s10 = ssub.s32 1, %s8
  %s11 = scalar_select 0, %s10, %s8
  $region1: #{re_trans_forward.1} parent=0
    #allocation2 [shape = 'u8[1024]{0}', space=vmem, size = 0x400, scoped, tag = 'output window, operand 0, single buffered']
    #allocation3 [shape = 's32[1]{0}', space=sflag, size = 0x4, scoped, tag = 'scoped memory for re_trans_forward.1']
    %12 = vsyncpa [#allocation3], 0
    // Predicated region
    $region2: #{re_trans_forward.1} parent=1 // pred_check
      _
    $region3: #{re_trans_forward.1} parent=1 // pred_check_branch
      %14 = sbr.rel (0) target = $region5
    $region4: #{re_trans_forward.1} parent=1 // pred_region
      _
    $region5: #{re_trans_forward.1} parent=1 // pred_fallthru
      _
    // Predicated region
    $region6: #{re_trans_forward.1} parent=1 // pred_check
      _
    $region7: #{re_trans_forward.1} parent=1 // pred_check_branch
      %16 = sbr.rel (0) target = $region9
    $region8: #{re_trans_forward.1} parent=1 // pred_region
      _
    $region9: #{re_trans_forward.1} parent=1 // pred_fallthru
      _
    // Predicated region
    $region10: #{re_trans_forward.1} parent=1 // pred_check
      _
    $region11: #{re_trans_forward.1} parent=1 // pred_check_branch
      %18 = sbr.rel (0) target = $region13
    $region12: #{re_trans_forward.1} parent=1 // pred_region
      _
    $region13: #{re_trans_forward.1} parent=1 // pred_fallthru
      _
    // Predicated region
    $region14: #{re_trans_forward.1} parent=1 // pred_check
      _
    $region15: #{re_trans_forward.1} parent=1 // pred_check_branch
      %20 = sbr.rel (0) target = $region17
    $region16: #{re_trans_forward.1} parent=1 // pred_region
      _
    $region17: #{re_trans_forward.1} parent=1 // pred_fallthru
      _
    // Predicated region
    $region18: #{re_trans_forward.1} parent=1 // pred_check
      _
    $region19: #{re_trans_forward.1} parent=1 // pred_check_branch
      %22 = sbr.rel (0) target = $region21
    $region20: #{re_trans_forward.1} parent=1 // pred_region
      _
    $region21: #{re_trans_forward.1} parent=1 // pred_fallthru
      _
    // Predicated region
    $region22: #{re_trans_forward.1} parent=1 // pred_check
      _
    $region23: #{re_trans_forward.1} parent=1 // pred_check_branch
      %24 = sbr.rel (0) target = $region25
    $region24: #{re_trans_forward.1} parent=1 // pred_region
      _
    $region25: #{re_trans_forward.1} parent=1 // pred_fallthru
      _
    // Predicated region
    $region26: #{re_trans_forward.1} parent=1 // pred_check
      _
    $region27: #{re_trans_forward.1} parent=1 // pred_check_branch
      %26 = sbr.rel (0) target = $region29
    $region28: #{re_trans_forward.1} parent=1 // pred_region
      _
    $region29: #{re_trans_forward.1} parent=1 // pred_fallthru
      _
    %v28 = vld [vmem:[%s0] sm:$0x3f]
    %v30 = vcombine.high %v28, %v28
    %v32 = vunpack.c.l.s4 1983009808
    %v33 = vunpack.c.0.s8 %v32
    %v34 = vlaneseq
    %v35 = vshrl.u32 %v34, 7
    %v36 = vsub.s32 %v33, %v35
    %v37 = vrot.slane %v28, %v36
    %v39 = vunpack.c.l.s4 1983009808
    %v40 = vunpack.c.0.s8 %v39
    %v41 = vlaneseq
    %v42 = vshrl.u32 %v41, 7
    %v43 = vsub.s32 %v40, %v42
    %v44 = vrot.slane %v30, %v43
    %v45 = vcombine.high %v37, %v37
    %v49 = vpack.c.bf16 %v37, %v37
    %v50 = vpack.c.bf16 %v45, %v45
    %v51 = vpack.c.bf16 %v44, %v44
    %v52 = vld [vmem:[%s1] sm:$0xff]
    %v53 = vld [vmem:[%s1 + $0x8] sm:$0xf]
    %v54 = vld [vmem:[%s1 + $0xc] sm:$0xff]
    %v55 = vld [vmem:[%s1 + $0x14] sm:$0xf]
    %v56 = vld [vmem:[%s1 + $0x18] sm:$0xff]
    %v57 = vld [vmem:[%s1 + $0x20] sm:$0xf]
    %v58 = vld [vmem:[%s1 + $0x24] sm:$0xff]
    %v59 = vld [vmem:[%s1 + $0x2c] sm:$0xf]
    %v60 = vld [vmem:[%s1 + $0x30] sm:$0xff]
    %v61 = vld [vmem:[%s1 + $0x38] sm:$0xf]
    %v62 = vld [vmem:[%s1 + $0x3c] sm:$0xff]
    %v63 = vld [vmem:[%s1 + $0x44] sm:$0xf]
    %v64 = vld [vmem:[%s1 + $0x48] sm:$0xff]
    %v65 = vld [vmem:[%s1 + $0x50] sm:$0xf]
    %v66 = vld [vmem:[%s1 + $0x54] sm:$0xff]
    %v67 = vld [vmem:[%s1 + $0x5c] sm:$0xf]
    %v68 = vld [vmem:[%s1 + $0x60] sm:$0xff]
    %v69 = vld [vmem:[%s1 + $0x68] sm:$0xf]
    %v70 = vld [vmem:[%s1 + $0x6c] sm:$0xff]
    %v71 = vld [vmem:[%s1 + $0x74] sm:$0xf]
    %v72 = vld [vmem:[%s1 + $0x78] sm:$0xff]
    %v73 = vld [vmem:[%s1 + $0x80] sm:$0xf]
    %v74 = vld [vmem:[%s1 + $0x84] sm:$0xff]
    %v75 = vld [vmem:[%s1 + $0x8c] sm:$0xf]
    %v76 = vld [vmem:[%s1 + $0x90] sm:$0xff]
    %v77 = vld [vmem:[%s1 + $0x98] sm:$0xf]
    %v78 = vld [vmem:[%s1 + $0x9c] sm:$0xff]
    %v79 = vld [vmem:[%s1 + $0xa4] sm:$0xf]
    %v80 = vld [vmem:[%s1 + $0xa8] sm:$0xff]
    %v81 = vld [vmem:[%s1 + $0xb0] sm:$0xf]
    %v82 = vld [vmem:[%s1 + $0xb4] sm:$0xff]
    %v83 = vld [vmem:[%s1 + $0xbc] sm:$0xf]
    %v84 = vld [vmem:[%s1 + $0xc0] sm:$0xff]
    %v85 = vld [vmem:[%s1 + $0xc8] sm:$0xf]
    %v86 = vld [vmem:[%s1 + $0xcc] sm:$0xff]
    %v87 = vld [vmem:[%s1 + $0xd4] sm:$0xf]
    %v88 = vld [vmem:[%s1 + $0xd8] sm:$0xff]
    %v89 = vld [vmem:[%s1 + $0xe0] sm:$0xf]
    %v90 = vld [vmem:[%s1 + $0xe4] sm:$0xff]
    %v91 = vld [vmem:[%s1 + $0xec] sm:$0xf]
    %v92 = vld [vmem:[%s1 + $0xf0] sm:$0xff]
    %v93 = vld [vmem:[%s1 + $0xf8] sm:$0xf]
    %v94 = vld [vmem:[%s1 + $0xfc] sm:$0xff]
    %v95 = vld [vmem:[%s1 + $0x104] sm:$0xf]
    %v96 = vld [vmem:[%s1 + $0x108] sm:$0xff]
    %v97 = vld [vmem:[%s1 + $0x110] sm:$0xf]
    %v98 = vld [vmem:[%s1 + $0x114] sm:$0xff]
    %v99 = vld [vmem:[%s1 + $0x11c] sm:$0xf]
    %v100 = vld [vmem:[%s1 + $0x120] sm:$0xff]
    %v101 = vld [vmem:[%s1 + $0x128] sm:$0xf]
    %v102 = vld [vmem:[%s1 + $0x12c] sm:$0xff]
    %v103 = vld [vmem:[%s1 + $0x134] sm:$0xf]
    %v104 = vld [vmem:[%s1 + $0x138] sm:$0xff]
    %v105 = vld [vmem:[%s1 + $0x140] sm:$0xf]
    %v106 = vld [vmem:[%s1 + $0x144] sm:$0xff]
    %v107 = vld [vmem:[%s1 + $0x14c] sm:$0xf]
    %v108 = vld [vmem:[%s1 + $0x150] sm:$0xff]
    %v109 = vld [vmem:[%s1 + $0x158] sm:$0xf]
    %v110 = vld [vmem:[%s1 + $0x15c] sm:$0xff]
    %v111 = vld [vmem:[%s1 + $0x164] sm:$0xf]
    %v112 = vld [vmem:[%s1 + $0x168] sm:$0xff]
    %v113 = vld [vmem:[%s1 + $0x170] sm:$0xf]
    %v114 = vld [vmem:[%s1 + $0x174] sm:$0xff]
    %v115 = vld [vmem:[%s1 + $0x17c] sm:$0xf]
    %v116 = vld [vmem:[%s1 + $0x180] sm:$0xff]
    %v117 = vld [vmem:[%s1 + $0x188] sm:$0xf]
    %v118 = vld [vmem:[%s1 + $0x18c] sm:$0xff]
    %v119 = vld [vmem:[%s1 + $0x194] sm:$0xf]
    %v120 = vld [vmem:[%s1 + $0x198] sm:$0xff]
    %v121 = vld [vmem:[%s1 + $0x1a0] sm:$0xf]
    %v122 = vld [vmem:[%s1 + $0x1a4] sm:$0xff]
    %v123 = vld [vmem:[%s1 + $0x1ac] sm:$0xf]
    %v124 = vld [vmem:[%s1 + $0x1b0] sm:$0xff]
    %v125 = vld [vmem:[%s1 + $0x1b8] sm:$0xf]
    %v126 = vld [vmem:[%s1 + $0x1bc] sm:$0xff]
    %v127 = vld [vmem:[%s1 + $0x1c4] sm:$0xf]
    %v128 = vld [vmem:[%s1 + $0x1c8] sm:$0xff]
    %v129 = vld [vmem:[%s1 + $0x1d0] sm:$0xf]
    %v130 = vld [vmem:[%s1 + $0x1d4] sm:$0xff]
    %v131 = vld [vmem:[%s1 + $0x1dc] sm:$0xf]
    %v132 = vld [vmem:[%s1 + $0x1e0] sm:$0xff]
    %v133 = vld [vmem:[%s1 + $0x1e8] sm:$0xf]
    %v134 = vld [vmem:[%s1 + $0x1ec] sm:$0xff]
    %v135 = vld [vmem:[%s1 + $0x1f4] sm:$0xf]
    %v136 = vld [vmem:[%s1 + $0x1f8] sm:$0xff]
    %v137 = vld [vmem:[%s1 + $0x200] sm:$0xf]
    %v138 = vld [vmem:[%s1 + $0x204] sm:$0xff]
    %v139 = vld [vmem:[%s1 + $0x20c] sm:$0xf]
    %v140 = vld [vmem:[%s2] sm:$0x7]
    %v142 = vlaneseq
    %v143 = vshrl.u32 %v142, 7
    %v144 = vsub.s32 0, %v143
    %v145 = vrot.slane %v140, %v144
    %v146 = vlaneseq
    %v147 = vshrl.u32 %v146, 7
    %v148 = vsub.s32 1, %v147
    %v149 = vrot.slane %v140, %v148
    %v150 = vlaneseq
    %v151 = vshrl.u32 %v150, 7
    %v152 = vsub.s32 2, %v151
    %v153 = vrot.slane %v140, %v152
    %v245 = vunpack.c.l.b16 %v52
    %v246 = vunpack.c.h.b16 %v52
    %v247 = vunpack.c.l.b16 %v53
    %v248 = vunpack.c.l.b16 %v54
    %v249 = vunpack.c.h.b16 %v54
    %v250 = vunpack.c.l.b16 %v55
    %v251 = vunpack.c.l.b16 %v56
    %v252 = vunpack.c.h.b16 %v56
    %v253 = vunpack.c.l.b16 %v57
    %v254 = vunpack.c.l.b16 %v58
    %v255 = vunpack.c.h.b16 %v58
    %v256 = vunpack.c.l.b16 %v59
    %v257 = vunpack.c.l.b16 %v60
    %v258 = vunpack.c.h.b16 %v60
    %v259 = vunpack.c.l.b16 %v61
    %v260 = vunpack.c.l.b16 %v62
    %v261 = vunpack.c.h.b16 %v62
    %v262 = vunpack.c.l.b16 %v63
    %v263 = vunpack.c.l.b16 %v64
    %v264 = vunpack.c.h.b16 %v64
    %v265 = vunpack.c.l.b16 %v65
    %v266 = vunpack.c.l.b16 %v66
    %v267 = vunpack.c.h.b16 %v66
    %v268 = vunpack.c.l.b16 %v67
    %v269 = vunpack.c.l.b16 %v68
    %v270 = vunpack.c.h.b16 %v68
    %v271 = vunpack.c.l.b16 %v69
    %v272 = vunpack.c.l.b16 %v70
    %v273 = vunpack.c.h.b16 %v70
    %v274 = vunpack.c.l.b16 %v71
    %v275 = vunpack.c.l.b16 %v72
    %v276 = vunpack.c.h.b16 %v72
    %v277 = vunpack.c.l.b16 %v73
    %v278 = vunpack.c.l.b16 %v74
    %v279 = vunpack.c.h.b16 %v74
    %v280 = vunpack.c.l.b16 %v75
    %v281 = vunpack.c.l.b16 %v76
    %v282 = vunpack.c.h.b16 %v76
    %v283 = vunpack.c.l.b16 %v77
    %v284 = vunpack.c.l.b16 %v78
    %v285 = vunpack.c.h.b16 %v78
    %v286 = vunpack.c.l.b16 %v79
    %v287 = vunpack.c.l.b16 %v80
    %v288 = vunpack.c.h.b16 %v80
    %v289 = vunpack.c.l.b16 %v81
    %v290 = vunpack.c.l.b16 %v82
    %v291 = vunpack.c.h.b16 %v82
    %v292 = vunpack.c.l.b16 %v83
    %v293 = vunpack.c.l.b16 %v84
    %v294 = vunpack.c.h.b16 %v84
    %v295 = vunpack.c.l.b16 %v85
    %v296 = vunpack.c.l.b16 %v86
    %v297 = vunpack.c.h.b16 %v86
    %v298 = vunpack.c.l.b16 %v87
    %v299 = vunpack.c.l.b16 %v88
    %v300 = vunpack.c.h.b16 %v88
    %v301 = vunpack.c.l.b16 %v89
    %v302 = vunpack.c.l.b16 %v90
    %v303 = vunpack.c.h.b16 %v90
    %v304 = vunpack.c.l.b16 %v91
    %v305 = vunpack.c.l.b16 %v92
    %v306 = vunpack.c.h.b16 %v92
    %v307 = vunpack.c.l.b16 %v93
    %v308 = vunpack.c.l.b16 %v94
    %v309 = vunpack.c.h.b16 %v94
    %v310 = vunpack.c.l.b16 %v95
    %v311 = vunpack.c.l.b16 %v96
    %v312 = vunpack.c.h.b16 %v96
    %v313 = vunpack.c.l.b16 %v97
    %v314 = vunpack.c.l.b16 %v98
    %v315 = vunpack.c.h.b16 %v98
    %v316 = vunpack.c.l.b16 %v99
    %v317 = vunpack.c.l.b16 %v100
    %v318 = vunpack.c.h.b16 %v100
    %v319 = vunpack.c.l.b16 %v101
    %v320 = vunpack.c.l.b16 %v102
    %v321 = vunpack.c.h.b16 %v102
    %v322 = vunpack.c.l.b16 %v103
    %v323 = vunpack.c.l.b16 %v104
    %v324 = vunpack.c.h.b16 %v104
    %v325 = vunpack.c.l.b16 %v105
    %v326 = vunpack.c.l.b16 %v106
    %v327 = vunpack.c.h.b16 %v106
    %v328 = vunpack.c.l.b16 %v107
    %v329 = vunpack.c.l.b16 %v108
    %v330 = vunpack.c.h.b16 %v108
    %v331 = vunpack.c.l.b16 %v109
    %v332 = vunpack.c.l.b16 %v110
    %v333 = vunpack.c.h.b16 %v110
    %v334 = vunpack.c.l.b16 %v111
    %v335 = vunpack.c.l.b16 %v112
    %v336 = vunpack.c.h.b16 %v112
    %v337 = vunpack.c.l.b16 %v113
    %v338 = vunpack.c.l.b16 %v114
    %v339 = vunpack.c.h.b16 %v114
    %v340 = vunpack.c.l.b16 %v115
    %v341 = vunpack.c.l.b16 %v116
    %v342 = vunpack.c.h.b16 %v116
    %v343 = vunpack.c.l.b16 %v117
    %v344 = vunpack.c.l.b16 %v118
    %v345 = vunpack.c.h.b16 %v118
    %v346 = vunpack.c.l.b16 %v119
    %v347 = vunpack.c.l.b16 %v120
    %v348 = vunpack.c.h.b16 %v120
    %v349 = vunpack.c.l.b16 %v121
    %v350 = vunpack.c.l.b16 %v122
    %v351 = vunpack.c.h.b16 %v122
    %v352 = vunpack.c.l.b16 %v123
    %v353 = vunpack.c.l.b16 %v124
    %v354 = vunpack.c.h.b16 %v124
    %v355 = vunpack.c.l.b16 %v125
    %v356 = vunpack.c.l.b16 %v126
    %v357 = vunpack.c.h.b16 %v126
    %v358 = vunpack.c.l.b16 %v127
    %v359 = vunpack.c.l.b16 %v128
    %v360 = vunpack.c.h.b16 %v128
    %v361 = vunpack.c.l.b16 %v129
    %v362 = vunpack.c.l.b16 %v130
    %v363 = vunpack.c.h.b16 %v130
    %v364 = vunpack.c.l.b16 %v131
    %v365 = vunpack.c.l.b16 %v132
    %v366 = vunpack.c.h.b16 %v132
    %v367 = vunpack.c.l.b16 %v133
    %v368 = vunpack.c.l.b16 %v134
    %v369 = vunpack.c.h.b16 %v134
    %v370 = vunpack.c.l.b16 %v135
    %v371 = vunpack.c.l.b16 %v136
    %v372 = vunpack.c.h.b16 %v136
    %v373 = vunpack.c.l.b16 %v137
    %v374 = vunpack.c.l.b16 %v138
    %v375 = vunpack.c.h.b16 %v138
    %v376 = vunpack.c.l.b16 %v139
    %v377 = vpack.c.b16 %v248, %v245
    %v378 = vpack.c.b16 %v249, %v246
    %v379 = vpack.c.b16 %v250, %v247
    %v380 = vpack.c.b16 %v254, %v251
    %v381 = vpack.c.b16 %v255, %v252
    %v382 = vpack.c.b16 %v256, %v253
    %v383 = vpack.c.b16 %v260, %v257
    %v384 = vpack.c.b16 %v261, %v258
    %v385 = vpack.c.b16 %v262, %v259
    %v386 = vpack.c.b16 %v266, %v263
    %v387 = vpack.c.b16 %v267, %v264
    %v388 = vpack.c.b16 %v268, %v265
    %v389 = vpack.c.b16 %v272, %v269
    %v390 = vpack.c.b16 %v273, %v270
    %v391 = vpack.c.b16 %v274, %v271
    %v392 = vpack.c.b16 %v278, %v275
    %v393 = vpack.c.b16 %v279, %v276
    %v394 = vpack.c.b16 %v280, %v277
    %v395 = vpack.c.b16 %v284, %v281
    %v396 = vpack.c.b16 %v285, %v282
    %v397 = vpack.c.b16 %v286, %v283
    %v398 = vpack.c.b16 %v290, %v287
    %v399 = vpack.c.b16 %v291, %v288
    %v400 = vpack.c.b16 %v292, %v289
    %v401 = vpack.c.b16 %v296, %v293
    %v402 = vpack.c.b16 %v297, %v294
    %v403 = vpack.c.b16 %v298, %v295
    %v404 = vpack.c.b16 %v302, %v299
    %v405 = vpack.c.b16 %v303, %v300
    %v406 = vpack.c.b16 %v304, %v301
    %v407 = vpack.c.b16 %v308, %v305
    %v408 = vpack.c.b16 %v309, %v306
    %v409 = vpack.c.b16 %v310, %v307
    %v410 = vpack.c.b16 %v314, %v311
    %v411 = vpack.c.b16 %v315, %v312
    %v412 = vpack.c.b16 %v316, %v313
    %v413 = vpack.c.b16 %v320, %v317
    %v414 = vpack.c.b16 %v321, %v318
    %v415 = vpack.c.b16 %v322, %v319
    %v416 = vpack.c.b16 %v326, %v323
    %v417 = vpack.c.b16 %v327, %v324
    %v418 = vpack.c.b16 %v328, %v325
    %v419 = vpack.c.b16 %v332, %v329
    %v420 = vpack.c.b16 %v333, %v330
    %v421 = vpack.c.b16 %v334, %v331
    %v422 = vpack.c.b16 %v338, %v335
    %v423 = vpack.c.b16 %v339, %v336
    %v424 = vpack.c.b16 %v340, %v337
    %v425 = vpack.c.b16 %v344, %v341
    %v426 = vpack.c.b16 %v345, %v342
    %v427 = vpack.c.b16 %v346, %v343
    %v428 = vpack.c.b16 %v350, %v347
    %v429 = vpack.c.b16 %v351, %v348
    %v430 = vpack.c.b16 %v352, %v349
    %v431 = vpack.c.b16 %v356, %v353
    %v432 = vpack.c.b16 %v357, %v354
    %v433 = vpack.c.b16 %v358, %v355
    %v434 = vpack.c.b16 %v362, %v359
    %v435 = vpack.c.b16 %v363, %v360
    %v436 = vpack.c.b16 %v364, %v361
    %v437 = vpack.c.b16 %v368, %v365
    %v438 = vpack.c.b16 %v369, %v366
    %v439 = vpack.c.b16 %v370, %v367
    %v440 = vpack.c.b16 %v374, %v371
    %v441 = vpack.c.b16 %v375, %v372
    %v442 = vpack.c.b16 %v376, %v373
    %vm509 = vcmask 785408
    %v511 = vsel %vm509, %v51, 0
    %513 = vmatprep.subr.bf16.mxu0 %v399
    %514 = vmatpush1.bf16.msra.mxu0 %v398
    %515 = vmatprep.subr.bf16.mxu0 %v396
    %516 = vmatpush1.bf16.msra.mxu0 %v395
    %517 = vmatprep.subr.bf16.mxu0 %v393
    %518 = vmatpush1.bf16.msra.mxu0 %v392
    %519 = vmatprep.subr.bf16.mxu0 %v390
    %520 = vmatpush1.bf16.msra.mxu0 %v389
    %521 = vmatprep.subr.bf16.mxu0 %v387
    %522 = vmatpush1.bf16.msra.mxu0 %v386
    %523 = vmatprep.subr.bf16.mxu0 %v384
    %524 = vmatpush1.bf16.msra.mxu0 %v383
    %525 = vmatprep.subr.bf16.mxu0 %v381
    %526 = vmatpush1.bf16.msra.mxu0 %v380
    %527 = vmatprep.subr.bf16.mxu0 %v378
    %528 = vmatpush1.bf16.msra.mxu0 %v377
    %529 = vmatprep.subr.bf16.mxu0 %v423
    %530 = vmatpush2.bf16.msra.mxu0 %v422
    %531 = vmatprep.subr.bf16.mxu0 %v420
    %532 = vmatpush2.bf16.msra.mxu0 %v419
    %533 = vmatprep.subr.bf16.mxu0 %v417
    %534 = vmatpush2.bf16.msra.mxu0 %v416
    %535 = vmatprep.subr.bf16.mxu0 %v414
    %536 = vmatpush2.bf16.msra.mxu0 %v413
    %537 = vmatprep.subr.bf16.mxu0 %v411
    %538 = vmatpush2.bf16.msra.mxu0 %v410
    %539 = vmatprep.subr.bf16.mxu0 %v408
    %540 = vmatpush2.bf16.msra.mxu0 %v407
    %541 = vmatprep.subr.bf16.mxu0 %v405
    %542 = vmatpush2.bf16.msra.mxu0 %v404
    %543 = vmatprep.subr.bf16.mxu0 %v402
    %544 = vmatpush2.bf16.msra.mxu0 %v401
    %545 = vmatprep.mubr.bf16.mxu0 %v50
    %546 = vmatmul.mubr.bf16.gmra.mxu0 %v49
    %v547 = vpop.f32.mrf.mxu0
    %v548 = vadd.f32 %v145, %v547
    %v549 = vpop.f32.mrf.mxu0
    %v550 = vadd.f32 %v149, %v549
    %v551 = vpop.f32.mrf.mxu0
    %v552 = vpop.f32.mrf.mxu0
    %553 = vdwg.mxu0
    %554 = vmatprep.subr.bf16.mxu0 0
    %555 = vmatpush1.bf16.msra.mxu0 0
    %556 = vmatprep.subr.bf16.mxu0 0
    %557 = vmatpush1.bf16.msra.mxu0 0
    %558 = vmatprep.subr.bf16.mxu0 %v441
    %559 = vmatpush1.bf16.msra.mxu0 %v440
    %560 = vmatprep.subr.bf16.mxu0 %v438
    %561 = vmatpush1.bf16.msra.mxu0 %v437
    %562 = vmatprep.subr.bf16.mxu0 %v435
    %563 = vmatpush1.bf16.msra.mxu0 %v434
    %564 = vmatprep.subr.bf16.mxu0 %v432
    %565 = vmatpush1.bf16.msra.mxu0 %v431
    %566 = vmatprep.subr.bf16.mxu0 %v429
    %567 = vmatpush1.bf16.msra.mxu0 %v428
    %568 = vmatprep.subr.bf16.mxu0 %v426
    %569 = vmatpush1.bf16.msra.mxu0 %v425
    %570 = vmatprep.subr.bf16.mxu0 0
    %571 = vmatpush2.bf16.msra.mxu0 0
    %572 = vmatprep.subr.bf16.mxu0 0
    %573 = vmatpush2.bf16.msra.mxu0 0
    %574 = vmatprep.subr.bf16.mxu0 0
    %575 = vmatpush2.bf16.msra.mxu0 0
    %576 = vmatprep.subr.bf16.mxu0 0
    %577 = vmatpush2.bf16.msra.mxu0 0
    %578 = vmatprep.subr.bf16.mxu0 0
    %579 = vmatpush2.bf16.msra.mxu0 0
    %580 = vmatprep.subr.bf16.mxu0 0
    %581 = vmatpush2.bf16.msra.mxu0 0
    %582 = vmatprep.subr.bf16.mxu0 0
    %583 = vmatpush2.bf16.msra.mxu0 0
    %584 = vmatprep.subr.bf16.mxu0 0
    %585 = vmatpush2.bf16.msra.mxu0 0
    %586 = vmatprep.mubr.bf16.mxu0 0
    %587 = vmatmul.mubr.bf16.gmra.mxu0 %v511
    %v588 = vpop.f32.mrf.mxu0
    %v589 = vadd.f32 %v548, %v588
    %v590 = vpop.f32.mrf.mxu0
    %v591 = vadd.f32 %v550, %v590
    %v592 = vpop.f32.mrf.mxu0
    %v593 = vpop.f32.mrf.mxu0
    %594 = vdwg.mxu0
    %595 = vmatprep.subr.bf16.mxu0 0
    %596 = vmatpush1.bf16.msra.mxu0 %v400
    %597 = vmatprep.subr.bf16.mxu0 0
    %598 = vmatpush1.bf16.msra.mxu0 %v397
    %599 = vmatprep.subr.bf16.mxu0 0
    %600 = vmatpush1.bf16.msra.mxu0 %v394
    %601 = vmatprep.subr.bf16.mxu0 0
    %602 = vmatpush1.bf16.msra.mxu0 %v391
    %603 = vmatprep.subr.bf16.mxu0 0
    %604 = vmatpush1.bf16.msra.mxu0 %v388
    %605 = vmatprep.subr.bf16.mxu0 0
    %606 = vmatpush1.bf16.msra.mxu0 %v385
    %607 = vmatprep.subr.bf16.mxu0 0
    %608 = vmatpush1.bf16.msra.mxu0 %v382
    %609 = vmatprep.subr.bf16.mxu0 0
    %610 = vmatpush1.bf16.msra.mxu0 %v379
    %611 = vmatprep.subr.bf16.mxu0 0
    %612 = vmatpush2.bf16.msra.mxu0 %v424
    %613 = vmatprep.subr.bf16.mxu0 0
    %614 = vmatpush2.bf16.msra.mxu0 %v421
    %615 = vmatprep.subr.bf16.mxu0 0
    %616 = vmatpush2.bf16.msra.mxu0 %v418
    %617 = vmatprep.subr.bf16.mxu0 0
    %618 = vmatpush2.bf16.msra.mxu0 %v415
    %619 = vmatprep.subr.bf16.mxu0 0
    %620 = vmatpush2.bf16.msra.mxu0 %v412
    %621 = vmatprep.subr.bf16.mxu0 0
    %622 = vmatpush2.bf16.msra.mxu0 %v409
    %623 = vmatprep.subr.bf16.mxu0 0
    %624 = vmatpush2.bf16.msra.mxu0 %v406
    %625 = vmatprep.subr.bf16.mxu0 0
    %626 = vmatpush2.bf16.msra.mxu0 %v403
    %627 = vmatprep.mubr.bf16.mxu0 %v50
    %628 = vmatmul.mubr.bf16.gmra.mxu0 %v49
    %v629 = vpop.f32.mrf.mxu0
    %v630 = vadd.f32 %v153, %v629
    %v631 = vpop.f32.mrf.mxu0
    %v632 = vpop.f32.mrf.mxu0
    %v633 = vpop.f32.mrf.mxu0
    %634 = vdwg.mxu0
    %635 = vmatprep.subr.bf16.mxu0 0
    %636 = vmatpush1.bf16.msra.mxu0 0
    %637 = vmatprep.subr.bf16.mxu0 0
    %638 = vmatpush1.bf16.msra.mxu0 0
    %639 = vmatprep.subr.bf16.mxu0 0
    %640 = vmatpush1.bf16.msra.mxu0 %v442
    %641 = vmatprep.subr.bf16.mxu0 0
    %642 = vmatpush1.bf16.msra.mxu0 %v439
    %643 = vmatprep.subr.bf16.mxu0 0
    %644 = vmatpush1.bf16.msra.mxu0 %v436
    %645 = vmatprep.subr.bf16.mxu0 0
    %646 = vmatpush1.bf16.msra.mxu0 %v433
    %647 = vmatprep.subr.bf16.mxu0 0
    %648 = vmatpush1.bf16.msra.mxu0 %v430
    %649 = vmatprep.subr.bf16.mxu0 0
    %650 = vmatpush1.bf16.msra.mxu0 %v427
    %651 = vmatprep.subr.bf16.mxu0 0
    %652 = vmatpush2.bf16.msra.mxu0 0
    %653 = vmatprep.subr.bf16.mxu0 0
    %654 = vmatpush2.bf16.msra.mxu0 0
    %655 = vmatprep.subr.bf16.mxu0 0
    %656 = vmatpush2.bf16.msra.mxu0 0
    %657 = vmatprep.subr.bf16.mxu0 0
    %658 = vmatpush2.bf16.msra.mxu0 0
    %659 = vmatprep.subr.bf16.mxu0 0
    %660 = vmatpush2.bf16.msra.mxu0 0
    %661 = vmatprep.subr.bf16.mxu0 0
    %662 = vmatpush2.bf16.msra.mxu0 0
    %663 = vmatprep.subr.bf16.mxu0 0
    %664 = vmatpush2.bf16.msra.mxu0 0
    %665 = vmatprep.subr.bf16.mxu0 0
    %666 = vmatpush2.bf16.msra.mxu0 0
    %667 = vmatprep.mubr.bf16.mxu0 0
    %668 = vmatmul.mubr.bf16.gmra.mxu0 %v511
    %v669 = vpop.f32.mrf.mxu0
    %v670 = vadd.f32 %v630, %v669
    %v671 = vpop.f32.mrf.mxu0
    %v672 = vpop.f32.mrf.mxu0
    %v673 = vpop.f32.mrf.mxu0
    %674 = vdwg.mxu0
    %v675 = vmax.f32 %v589, 0.0
    %v676 = vmax.f32 %v591, 0.0
    %v677 = vmax.f32 %v670, 0.0
    %v678 = vpack.c.bf16 %v675, %v675
    %v679 = vpack.c.bf16 %v676, %v676
    %v680 = vpack.c.bf16 %v677, %v677
    %v681 = vld [vmem:[%s3] sm:$0xff]
    %v682 = vld [vmem:[%s3 + $0x8] sm:$0xff]
    %v683 = vld [vmem:[%s3 + $0x10] sm:$0xff]
    %v684 = vld [vmem:[%s3 + $0x18] sm:$0xff]
    %v685 = vld [vmem:[%s3 + $0x20] sm:$0xff]
    %v686 = vld [vmem:[%s3 + $0x28] sm:$0xff]
    %v687 = vld [vmem:[%s3 + $0x30] sm:$0xff]
    %v688 = vld [vmem:[%s3 + $0x38] sm:$0xff]
    %v689 = vld [vmem:[%s3 + $0x40] sm:$0xff]
    %v690 = vld [vmem:[%s3 + $0x48] sm:$0xff]
    %v691 = vld [vmem:[%s3 + $0x50] sm:$0xff]
    %v692 = vld [vmem:[%s3 + $0x58] sm:$0xff]
    %v693 = vld [vmem:[%s3 + $0x60] sm:$0xff]
    %v694 = vld [vmem:[%s3 + $0x68] sm:$0xff]
    %v695 = vld [vmem:[%s3 + $0x70] sm:$0xff]
    %v696 = vld [vmem:[%s3 + $0x78] sm:$0xff]
    %v697 = vld [vmem:[%s3 + $0x80] sm:$0xff]
    %v698 = vld [vmem:[%s3 + $0x88] sm:$0xff]
    %v699 = vld [vmem:[%s3 + $0x90] sm:$0xff]
    %v700 = vld [vmem:[%s3 + $0x98] sm:$0xff]
    %v701 = vld [vmem:[%s3 + $0xa0] sm:$0xff]
    %v702 = vld [vmem:[%s3 + $0xa8] sm:$0xff]
    %v703 = vld [vmem:[%s3 + $0xb0] sm:$0xff]
    %v704 = vld [vmem:[%s3 + $0xb8] sm:$0xff]
    %v705 = vld [vmem:[%s3 + $0xc0] sm:$0xff]
    %v706 = vld [vmem:[%s3 + $0xc8] sm:$0xff]
    %v707 = vld [vmem:[%s3 + $0xd0] sm:$0xff]
    %v708 = vld [vmem:[%s3 + $0xd8] sm:$0xff]
    %v709 = vld [vmem:[%s3 + $0xe0] sm:$0xff]
    %v710 = vld [vmem:[%s3 + $0xe8] sm:$0xff]
    %v711 = vld [vmem:[%s3 + $0xf0] sm:$0xff]
    %v712 = vld [vmem:[%s3 + $0xf8] sm:$0xff]
    %v713 = vld [vmem:[%s3 + $0x100] sm:$0xff]
    %v714 = vld [vmem:[%s3 + $0x108] sm:$0xff]
    %v715 = vld [vmem:[%s3 + $0x110] sm:$0xff]
    %v716 = vld [vmem:[%s3 + $0x118] sm:$0xff]
    %v717 = vld [vmem:[%s3 + $0x120] sm:$0xff]
    %v718 = vld [vmem:[%s3 + $0x128] sm:$0xff]
    %v719 = vld [vmem:[%s3 + $0x130] sm:$0xff]
    %v720 = vld [vmem:[%s3 + $0x138] sm:$0xff]
    %v721 = vld [vmem:[%s3 + $0x140] sm:$0xff]
    %v722 = vld [vmem:[%s3 + $0x148] sm:$0xff]
    %v723 = vld [vmem:[%s3 + $0x150] sm:$0xff]
    %v724 = vld [vmem:[%s3 + $0x158] sm:$0xff]
    %v725 = vld [vmem:[%s3 + $0x160] sm:$0xff]
    %v726 = vld [vmem:[%s3 + $0x168] sm:$0xff]
    %v727 = vld [vmem:[%s3 + $0x170] sm:$0xff]
    %v728 = vld [vmem:[%s3 + $0x178] sm:$0xff]
    %v729 = vld [vmem:[%s4] sm:$0x3]
    %v731 = vlaneseq
    %v732 = vshrl.u32 %v731, 7
    %v733 = vsub.s32 0, %v732
    %v734 = vrot.slane %v729, %v733
    %v735 = vlaneseq
    %v736 = vshrl.u32 %v735, 7
    %v737 = vsub.s32 1, %v736
    %v738 = vrot.slane %v729, %v737
    %v789 = vunpack.c.l.b16 %v681
    %v790 = vunpack.c.h.b16 %v681
    %v791 = vunpack.c.l.b16 %v682
    %v792 = vunpack.c.h.b16 %v682
    %v793 = vunpack.c.l.b16 %v683
    %v794 = vunpack.c.h.b16 %v683
    %v795 = vunpack.c.l.b16 %v684
    %v796 = vunpack.c.h.b16 %v684
    %v797 = vunpack.c.l.b16 %v685
    %v798 = vunpack.c.h.b16 %v685
    %v799 = vunpack.c.l.b16 %v686
    %v800 = vunpack.c.h.b16 %v686
    %v801 = vunpack.c.l.b16 %v687
    %v802 = vunpack.c.h.b16 %v687
    %v803 = vunpack.c.l.b16 %v688
    %v804 = vunpack.c.h.b16 %v688
    %v805 = vunpack.c.l.b16 %v689
    %v806 = vunpack.c.h.b16 %v689
    %v807 = vunpack.c.l.b16 %v690
    %v808 = vunpack.c.h.b16 %v690
    %v809 = vunpack.c.l.b16 %v691
    %v810 = vunpack.c.h.b16 %v691
    %v811 = vunpack.c.l.b16 %v692
    %v812 = vunpack.c.h.b16 %v692
    %v813 = vunpack.c.l.b16 %v693
    %v814 = vunpack.c.h.b16 %v693
    %v815 = vunpack.c.l.b16 %v694
    %v816 = vunpack.c.h.b16 %v694
    %v817 = vunpack.c.l.b16 %v695
    %v818 = vunpack.c.h.b16 %v695
    %v819 = vunpack.c.l.b16 %v696
    %v820 = vunpack.c.h.b16 %v696
    %v821 = vunpack.c.l.b16 %v697
    %v822 = vunpack.c.h.b16 %v697
    %v823 = vunpack.c.l.b16 %v698
    %v824 = vunpack.c.h.b16 %v698
    %v825 = vunpack.c.l.b16 %v699
    %v826 = vunpack.c.h.b16 %v699
    %v827 = vunpack.c.l.b16 %v700
    %v828 = vunpack.c.h.b16 %v700
    %v829 = vunpack.c.l.b16 %v701
    %v830 = vunpack.c.h.b16 %v701
    %v831 = vunpack.c.l.b16 %v702
    %v832 = vunpack.c.h.b16 %v702
    %v833 = vunpack.c.l.b16 %v703
    %v834 = vunpack.c.h.b16 %v703
    %v835 = vunpack.c.l.b16 %v704
    %v836 = vunpack.c.h.b16 %v704
    %v837 = vunpack.c.l.b16 %v705
    %v838 = vunpack.c.h.b16 %v705
    %v839 = vunpack.c.l.b16 %v706
    %v840 = vunpack.c.h.b16 %v706
    %v841 = vunpack.c.l.b16 %v707
    %v842 = vunpack.c.h.b16 %v707
    %v843 = vunpack.c.l.b16 %v708
    %v844 = vunpack.c.h.b16 %v708
    %v845 = vunpack.c.l.b16 %v709
    %v846 = vunpack.c.h.b16 %v709
    %v847 = vunpack.c.l.b16 %v710
    %v848 = vunpack.c.h.b16 %v710
    %v849 = vunpack.c.l.b16 %v711
    %v850 = vunpack.c.h.b16 %v711
    %v851 = vunpack.c.l.b16 %v712
    %v852 = vunpack.c.h.b16 %v712
    %v853 = vunpack.c.l.b16 %v713
    %v854 = vunpack.c.h.b16 %v713
    %v855 = vunpack.c.l.b16 %v714
    %v856 = vunpack.c.h.b16 %v714
    %v857 = vunpack.c.l.b16 %v715
    %v858 = vunpack.c.h.b16 %v715
    %v859 = vunpack.c.l.b16 %v716
    %v860 = vunpack.c.h.b16 %v716
    %v861 = vunpack.c.l.b16 %v717
    %v862 = vunpack.c.h.b16 %v717
    %v863 = vunpack.c.l.b16 %v718
    %v864 = vunpack.c.h.b16 %v718
    %v865 = vunpack.c.l.b16 %v719
    %v866 = vunpack.c.h.b16 %v719
    %v867 = vunpack.c.l.b16 %v720
    %v868 = vunpack.c.h.b16 %v720
    %v869 = vunpack.c.l.b16 %v721
    %v870 = vunpack.c.h.b16 %v721
    %v871 = vunpack.c.l.b16 %v722
    %v872 = vunpack.c.h.b16 %v722
    %v873 = vunpack.c.l.b16 %v723
    %v874 = vunpack.c.h.b16 %v723
    %v875 = vunpack.c.l.b16 %v724
    %v876 = vunpack.c.h.b16 %v724
    %v877 = vunpack.c.l.b16 %v725
    %v878 = vunpack.c.h.b16 %v725
    %v879 = vunpack.c.l.b16 %v726
    %v880 = vunpack.c.h.b16 %v726
    %v881 = vunpack.c.l.b16 %v727
    %v882 = vunpack.c.h.b16 %v727
    %v883 = vunpack.c.l.b16 %v728
    %v884 = vunpack.c.h.b16 %v728
    %v885 = vpack.c.b16 %v791, %v789
    %v886 = vpack.c.b16 %v792, %v790
    %v887 = vpack.c.b16 %v795, %v793
    %v888 = vpack.c.b16 %v796, %v794
    %v889 = vpack.c.b16 %v799, %v797
    %v890 = vpack.c.b16 %v800, %v798
    %v891 = vpack.c.b16 %v803, %v801
    %v892 = vpack.c.b16 %v804, %v802
    %v893 = vpack.c.b16 %v807, %v805
    %v894 = vpack.c.b16 %v808, %v806
    %v895 = vpack.c.b16 %v811, %v809
    %v896 = vpack.c.b16 %v812, %v810
    %v897 = vpack.c.b16 %v815, %v813
    %v898 = vpack.c.b16 %v816, %v814
    %v899 = vpack.c.b16 %v819, %v817
    %v900 = vpack.c.b16 %v820, %v818
    %v901 = vpack.c.b16 %v823, %v821
    %v902 = vpack.c.b16 %v824, %v822
    %v903 = vpack.c.b16 %v827, %v825
    %v904 = vpack.c.b16 %v828, %v826
    %v905 = vpack.c.b16 %v831, %v829
    %v906 = vpack.c.b16 %v832, %v830
    %v907 = vpack.c.b16 %v835, %v833
    %v908 = vpack.c.b16 %v836, %v834
    %v909 = vpack.c.b16 %v839, %v837
    %v910 = vpack.c.b16 %v840, %v838
    %v911 = vpack.c.b16 %v843, %v841
    %v912 = vpack.c.b16 %v844, %v842
    %v913 = vpack.c.b16 %v847, %v845
    %v914 = vpack.c.b16 %v848, %v846
    %v915 = vpack.c.b16 %v851, %v849
    %v916 = vpack.c.b16 %v852, %v850
    %v917 = vpack.c.b16 %v855, %v853
    %v918 = vpack.c.b16 %v856, %v854
    %v919 = vpack.c.b16 %v859, %v857
    %v920 = vpack.c.b16 %v860, %v858
    %v921 = vpack.c.b16 %v863, %v861
    %v922 = vpack.c.b16 %v864, %v862
    %v923 = vpack.c.b16 %v867, %v865
    %v924 = vpack.c.b16 %v868, %v866
    %v925 = vpack.c.b16 %v871, %v869
    %v926 = vpack.c.b16 %v872, %v870
    %v927 = vpack.c.b16 %v875, %v873
    %v928 = vpack.c.b16 %v876, %v874
    %v929 = vpack.c.b16 %v879, %v877
    %v930 = vpack.c.b16 %v880, %v878
    %v931 = vpack.c.b16 %v883, %v881
    %v932 = vpack.c.b16 %v884, %v882
    %981 = vmatprep.subr.bf16.mxu0 %v900
    %982 = vmatpush1.bf16.msra.mxu0 %v899
    %983 = vmatprep.subr.bf16.mxu0 %v898
    %984 = vmatpush1.bf16.msra.mxu0 %v897
    %985 = vmatprep.subr.bf16.mxu0 %v896
    %986 = vmatpush1.bf16.msra.mxu0 %v895
    %987 = vmatprep.subr.bf16.mxu0 %v894
    %988 = vmatpush1.bf16.msra.mxu0 %v893
    %989 = vmatprep.subr.bf16.mxu0 %v892
    %990 = vmatpush1.bf16.msra.mxu0 %v891
    %991 = vmatprep.subr.bf16.mxu0 %v890
    %992 = vmatpush1.bf16.msra.mxu0 %v889
    %993 = vmatprep.subr.bf16.mxu0 %v888
    %994 = vmatpush1.bf16.msra.mxu0 %v887
    %995 = vmatprep.subr.bf16.mxu0 %v886
    %996 = vmatpush1.bf16.msra.mxu0 %v885
    %997 = vmatprep.subr.bf16.mxu0 %v916
    %998 = vmatpush2.bf16.msra.mxu0 %v915
    %999 = vmatprep.subr.bf16.mxu0 %v914
    %1000 = vmatpush2.bf16.msra.mxu0 %v913
    %1001 = vmatprep.subr.bf16.mxu0 %v912
    %1002 = vmatpush2.bf16.msra.mxu0 %v911
    %1003 = vmatprep.subr.bf16.mxu0 %v910
    %1004 = vmatpush2.bf16.msra.mxu0 %v909
    %1005 = vmatprep.subr.bf16.mxu0 %v908
    %1006 = vmatpush2.bf16.msra.mxu0 %v907
    %1007 = vmatprep.subr.bf16.mxu0 %v906
    %1008 = vmatpush2.bf16.msra.mxu0 %v905
    %1009 = vmatprep.subr.bf16.mxu0 %v904
    %1010 = vmatpush2.bf16.msra.mxu0 %v903
    %1011 = vmatprep.subr.bf16.mxu0 %v902
    %1012 = vmatpush2.bf16.msra.mxu0 %v901
    %1013 = vmatprep.mubr.bf16.mxu0 %v679
    %1014 = vmatmul.mubr.bf16.gmra.mxu0 %v678
    %v1015 = vpop.f32.mrf.mxu0
    %v1016 = vadd.f32 %v734, %v1015
    %v1017 = vpop.f32.mrf.mxu0
    %v1018 = vadd.f32 %v738, %v1017
    %v1019 = vpop.f32.mrf.mxu0
    %v1020 = vpop.f32.mrf.mxu0
    %1021 = vdwg.mxu0
    %1022 = vmatprep.subr.bf16.mxu0 %v932
    %1023 = vmatpush1.bf16.msra.mxu0 %v931
    %1024 = vmatprep.subr.bf16.mxu0 %v930
    %1025 = vmatpush1.bf16.msra.mxu0 %v929
    %1026 = vmatprep.subr.bf16.mxu0 %v928
    %1027 = vmatpush1.bf16.msra.mxu0 %v927
    %1028 = vmatprep.subr.bf16.mxu0 %v926
    %1029 = vmatpush1.bf16.msra.mxu0 %v925
    %1030 = vmatprep.subr.bf16.mxu0 %v924
    %1031 = vmatpush1.bf16.msra.mxu0 %v923
    %1032 = vmatprep.subr.bf16.mxu0 %v922
    %1033 = vmatpush1.bf16.msra.mxu0 %v921
    %1034 = vmatprep.subr.bf16.mxu0 %v920
    %1035 = vmatpush1.bf16.msra.mxu0 %v919
    %1036 = vmatprep.subr.bf16.mxu0 %v918
    %1037 = vmatpush1.bf16.msra.mxu0 %v917
    %1038 = vmatprep.subr.bf16.mxu0 0
    %1039 = vmatpush2.bf16.msra.mxu0 0
    %1040 = vmatprep.subr.bf16.mxu0 0
    %1041 = vmatpush2.bf16.msra.mxu0 0
    %1042 = vmatprep.subr.bf16.mxu0 0
    %1043 = vmatpush2.bf16.msra.mxu0 0
    %1044 = vmatprep.subr.bf16.mxu0 0
    %1045 = vmatpush2.bf16.msra.mxu0 0
    %1046 = vmatprep.subr.bf16.mxu0 0
    %1047 = vmatpush2.bf16.msra.mxu0 0
    %1048 = vmatprep.subr.bf16.mxu0 0
    %1049 = vmatpush2.bf16.msra.mxu0 0
    %1050 = vmatprep.subr.bf16.mxu0 0
    %1051 = vmatpush2.bf16.msra.mxu0 0
    %1052 = vmatprep.subr.bf16.mxu0 0
    %1053 = vmatpush2.bf16.msra.mxu0 0
    %1054 = vmatprep.mubr.bf16.mxu0 0
    %1055 = vmatmul.mubr.bf16.gmra.mxu0 %v680
    %v1056 = vpop.f32.mrf.mxu0
    %v1057 = vadd.f32 %v1016, %v1056
    %v1058 = vpop.f32.mrf.mxu0
    %v1059 = vadd.f32 %v1018, %v1058
    %v1060 = vpop.f32.mrf.mxu0
    %v1061 = vpop.f32.mrf.mxu0
    %1062 = vdwg.mxu0
    %v1063 = vmax.f32 %v1057, 0.0
    %v1064 = vmax.f32 %v1059, 0.0
    %v1065 = vpack.c.bf16 %v1063, %v1063
    %v1066 = vpack.c.bf16 %v1064, %v1064
    %v1067 = vld [vmem:[%s5] sm:$0xf]
    %v1068 = vld [vmem:[%s5 + $0x4] sm:$0xf]
    %v1069 = vld [vmem:[%s5 + $0x8] sm:$0xf]
    %v1070 = vld [vmem:[%s5 + $0xc] sm:$0xf]
    %v1071 = vld [vmem:[%s5 + $0x10] sm:$0xf]
    %v1072 = vld [vmem:[%s5 + $0x14] sm:$0xf]
    %v1073 = vld [vmem:[%s5 + $0x18] sm:$0xf]
    %v1074 = vld [vmem:[%s5 + $0x1c] sm:$0xf]
    %v1075 = vld [vmem:[%s5 + $0x20] sm:$0xf]
    %v1076 = vld [vmem:[%s5 + $0x24] sm:$0xf]
    %v1077 = vld [vmem:[%s5 + $0x28] sm:$0xf]
    %v1078 = vld [vmem:[%s5 + $0x2c] sm:$0xf]
    %v1079 = vld [vmem:[%s5 + $0x30] sm:$0xf]
    %v1080 = vld [vmem:[%s5 + $0x34] sm:$0xf]
    %v1081 = vld [vmem:[%s5 + $0x38] sm:$0xf]
    %v1082 = vld [vmem:[%s5 + $0x3c] sm:$0xf]
    %v1083 = vld [vmem:[%s5 + $0x40] sm:$0xf]
    %v1084 = vld [vmem:[%s5 + $0x44] sm:$0xf]
    %v1085 = vld [vmem:[%s5 + $0x48] sm:$0xf]
    %v1086 = vld [vmem:[%s5 + $0x4c] sm:$0xf]
    %v1087 = vld [vmem:[%s5 + $0x50] sm:$0xf]
    %v1088 = vld [vmem:[%s5 + $0x54] sm:$0xf]
    %v1089 = vld [vmem:[%s5 + $0x58] sm:$0xf]
    %v1090 = vld [vmem:[%s5 + $0x5c] sm:$0xf]
    %v1091 = vld [vmem:[%s6] sm:$0x1]
    %v1093 = vlaneseq
    %v1094 = vshrl.u32 %v1093, 7
    %v1095 = vsub.s32 0, %v1094
    %v1096 = vrot.slane %v1091, %v1095
    %v1122 = vunpack.c.l.b16 %v1067
    %v1123 = vunpack.c.l.b16 %v1068
    %v1124 = vunpack.c.l.b16 %v1069
    %v1125 = vunpack.c.l.b16 %v1070
    %v1126 = vunpack.c.l.b16 %v1071
    %v1127 = vunpack.c.l.b16 %v1072
    %v1128 = vunpack.c.l.b16 %v1073
    %v1129 = vunpack.c.l.b16 %v1074
    %v1130 = vunpack.c.l.b16 %v1075
    %v1131 = vunpack.c.l.b16 %v1076
    %v1132 = vunpack.c.l.b16 %v1077
    %v1133 = vunpack.c.l.b16 %v1078
    %v1134 = vunpack.c.l.b16 %v1079
    %v1135 = vunpack.c.l.b16 %v1080
    %v1136 = vunpack.c.l.b16 %v1081
    %v1137 = vunpack.c.l.b16 %v1082
    %v1138 = vunpack.c.l.b16 %v1083
    %v1139 = vunpack.c.l.b16 %v1084
    %v1140 = vunpack.c.l.b16 %v1085
    %v1141 = vunpack.c.l.b16 %v1086
    %v1142 = vunpack.c.l.b16 %v1087
    %v1143 = vunpack.c.l.b16 %v1088
    %v1144 = vunpack.c.l.b16 %v1089
    %v1145 = vunpack.c.l.b16 %v1090
    %v1146 = vpack.c.b16 %v1123, %v1122
    %v1147 = vpack.c.b16 %v1125, %v1124
    %v1148 = vpack.c.b16 %v1127, %v1126
    %v1149 = vpack.c.b16 %v1129, %v1128
    %v1150 = vpack.c.b16 %v1131, %v1130
    %v1151 = vpack.c.b16 %v1133, %v1132
    %v1152 = vpack.c.b16 %v1135, %v1134
    %v1153 = vpack.c.b16 %v1137, %v1136
    %v1154 = vpack.c.b16 %v1139, %v1138
    %v1155 = vpack.c.b16 %v1141, %v1140
    %v1156 = vpack.c.b16 %v1143, %v1142
    %v1157 = vpack.c.b16 %v1145, %v1144
    %vm1170 = vcmask 523264
    %v1172 = vsel %vm1170, %v1066, 0
    %1174 = vmatprep.subr.bf16.mxu0 0
    %1175 = vmatpush1.bf16.msra.mxu0 %v1153
    %1176 = vmatprep.subr.bf16.mxu0 0
    %1177 = vmatpush1.bf16.msra.mxu0 %v1152
    %1178 = vmatprep.subr.bf16.mxu0 0
    %1179 = vmatpush1.bf16.msra.mxu0 %v1151
    %1180 = vmatprep.subr.bf16.mxu0 0
    %1181 = vmatpush1.bf16.msra.mxu0 %v1150
    %1182 = vmatprep.subr.bf16.mxu0 0
    %1183 = vmatpush1.bf16.msra.mxu0 %v1149
    %1184 = vmatprep.subr.bf16.mxu0 0
    %1185 = vmatpush1.bf16.msra.mxu0 %v1148
    %1186 = vmatprep.subr.bf16.mxu0 0
    %1187 = vmatpush1.bf16.msra.mxu0 %v1147
    %1188 = vmatprep.subr.bf16.mxu0 0
    %1189 = vmatpush1.bf16.msra.mxu0 %v1146
    %1190 = vmatprep.subr.bf16.mxu0 0
    %1191 = vmatpush2.bf16.msra.mxu0 0
    %1192 = vmatprep.subr.bf16.mxu0 0
    %1193 = vmatpush2.bf16.msra.mxu0 0
    %1194 = vmatprep.subr.bf16.mxu0 0
    %1195 = vmatpush2.bf16.msra.mxu0 0
    %1196 = vmatprep.subr.bf16.mxu0 0
    %1197 = vmatpush2.bf16.msra.mxu0 0
    %1198 = vmatprep.subr.bf16.mxu0 0
    %1199 = vmatpush2.bf16.msra.mxu0 %v1157
    %1200 = vmatprep.subr.bf16.mxu0 0
    %1201 = vmatpush2.bf16.msra.mxu0 %v1156
    %1202 = vmatprep.subr.bf16.mxu0 0
    %1203 = vmatpush2.bf16.msra.mxu0 %v1155
    %1204 = vmatprep.subr.bf16.mxu0 0
    %1205 = vmatpush2.bf16.msra.mxu0 %v1154
    %1206 = vmatprep.mubr.bf16.mxu0 %v1172
    %1207 = vmatmul.mubr.bf16.gmra.mxu0 %v1065
    %v1208 = vpop.f32.mrf.mxu0
    %v1209 = vadd.f32 %v1096, %v1208
    %v1210 = vpop.f32.mrf.mxu0
    %v1211 = vpop.f32.mrf.mxu0
    %v1212 = vpop.f32.mrf.mxu0
    %1213 = vdwg.mxu0
    %1214 = vst [vmem:[#allocation2] sm:$0x3] %v1209
    // Predicated region
    $region30: #{re_trans_forward.1} parent=1 // pred_check
      _
    $region31: #{re_trans_forward.1} parent=1 // pred_check_branch
      %1216 = sbr.rel (0) target = $region33
    $region32: #{re_trans_forward.1} parent=1 // pred_region
      %s1218 = ssub.s32 32, 32
      %1219 = vsyncadd [#allocation3], %s1218
      %s1221 = sshll.u32 [#allocation2], 4
      %s1222 = int_to_ptr.vmem [resolvable:$true] %s1221
      %1224 = dma.vmem_to_hbm [thread:$0]  %s1222, 32, %s7, [#allocation3]
    $region33: #{re_trans_forward.1} parent=1 // pred_fallthru
      _
    // Predicated region
    $region34: #{re_trans_forward.1} parent=1 // pred_check
      _
    $region35: #{re_trans_forward.1} parent=1 // pred_check_branch
      %1226 = sbr.rel (0) target = $region37
    $region36: #{re_trans_forward.1} parent=1 // pred_region
      %1227 = dma.done [#allocation3], 32
    $region37: #{re_trans_forward.1} parent=1 // pred_fallthru
      _
    %1228 = vsyncpa [#allocation3], 1

</llo_original>
